<compile_context>
chip_gen: v7x
topology: tpu7x:2x2x1
jax: 0.10.0
libtpu: 0.0.40
codegen_flags: <defaults>
</compile_context>

<pallas_src>
import jax
import jax.numpy as jnp
from jax import lax
from jax.experimental import pallas as pl
from jax.experimental.pallas import tpu as pltpu


def _round_up(v, m):
    return ((v + m - 1) // m) * m


# ----------------------------------------------------------------------------
# Kernels
# ----------------------------------------------------------------------------
def _matmul_bias_kernel_f32out(x_ref, w_ref, b_ref, o_ref):
    # x_ref: (tm, tk), w_ref: (tn, tk), b_ref: (1, tn) f32, o_ref: (tm, tn) f32.
    # o_ref is resident across the K grid axis -> accumulate into it directly
    # (bias folded into the k == 0 init; no epilogue, no scratch).
    @pl.when(pl.program_id(2) == 0)
    def _():
        o_ref[...] = jnp.broadcast_to(b_ref[...], o_ref.shape)

    o_ref[...] += lax.dot_general(
        x_ref[...], w_ref[...],
        dimension_numbers=(((1,), (1,)), ((), ())),   # x @ W.T on the MXU
        preferred_element_type=jnp.float32)


def _matmul_bias_kernel_acc(x_ref, w_ref, b_ref, o_ref, acc_ref):
    # Narrow output dtype: f32 accumulator scratch, cast+store on last K step.
    k = pl.program_id(2)

    @pl.when(k == 0)
    def _():
        acc_ref[...] = jnp.broadcast_to(b_ref[...], acc_ref.shape)

    acc_ref[...] += lax.dot_general(
        x_ref[...], w_ref[...],
        dimension_numbers=(((1,), (1,)), ((), ())),
        preferred_element_type=jnp.float32)

    @pl.when(k == pl.num_programs(2) - 1)
    def _():
        o_ref[...] = acc_ref[...].astype(o_ref.dtype)


# ----------------------------------------------------------------------------
# One-time parameter prep (hoisted out of the per-forward path)
# ----------------------------------------------------------------------------
def prepare_presolved_linear_params(solved_w, solved_b, learned_w, learned_b,
                                    *, compute_dtype=None):
    """Stack presolved + learned parameters once (== the torch.cat).

    Call this once at init and reuse the result: it keeps the forward path free
    of weight concat / cast traffic.  `compute_dtype=jnp.bfloat16` stores the
    weight copy in the MXU operand dtype.
    """
    assert solved_w.shape[0] == solved_b.shape[0]
    assert learned_w.shape[0] == learned_b.shape[0]
    assert solved_w.shape[1] == learned_w.shape[1]
    w_dtype = compute_dtype if compute_dtype is not None else solved_w.dtype
    w_full = jnp.concatenate([solved_w, learned_w], axis=0).astype(w_dtype)      # [F, K]
    b_full = jnp.concatenate([solved_b, learned_b], axis=0).astype(jnp.float32)  # [F]
    return w_full, b_full.reshape(1, -1)                                          # [1, F]


# ----------------------------------------------------------------------------
# Forward
# ----------------------------------------------------------------------------
def presolved_linear_apply(x, w_full, b_full, *, tm=512, tn=512, tk=1024,
                           compute_dtype=None):
    """y = x @ w_full.T + b_full  (== cat([presolved, learned], dim=1))."""
    assert x.ndim == 2, "torch.cat(dim=1) in the reference implies 2-D input [N, K]"
    N, K = x.shape
    F, Kw = w_full.shape
    assert Kw == K and b_full.shape == (1, F)

    out_dtype = x.dtype
    cdt = jnp.dtype(compute_dtype) if compute_dtype is not None else jnp.dtype(w_full.dtype)
    xc = x.astype(cdt)
    wc = w_full.astype(cdt)           # no-op when prep already used compute_dtype
    bc = b_full.astype(jnp.float32)   # bias accumulated in f32

    # --- tile selection ------------------------------------------------------
    sublane = max(8, 32 // cdt.itemsize)        # 8 (f32), 16 (bf16), 32 (i8/fp8)
    tm = N if N <= tm else _round_up(tm, sublane)   # full-dim blocks are always legal
    tn = F if F <= tn else _round_up(tn, 128)

    # K must be covered exactly: zero-pad it (and only it) when it does not
    # divide.  M/F raggedness is handled by Pallas-masked edge blocks.
    if K <= tk:
        tk, Kp = K, K
    else:
        tk = _round_up(tk, 128)
        Kp = _round_up(K, tk)
    if Kp != K:
        xc = jnp.pad(xc, ((0, 0), (0, Kp - K)))
        wc = jnp.pad(wc, ((0, 0), (0, Kp - K)))

    grid_m = pl.cdiv(N, tm)
    # v7x has two TensorCores: when the M axis degenerates to one block, split
    # the F axis further so at least one "parallel" axis has extent >= 2.
    while grid_m == 1 and tn > 128 and pl.cdiv(F, tn) < 2:
        tn = max(128, _round_up(tn // 2, 128))
    grid_n = pl.cdiv(F, tn)
    grid_k = Kp // tk

    # --- kernel / scratch / VMEM budget --------------------------------------
    out_is_f32 = jnp.dtype(out_dtype) == jnp.float32
    kernel = _matmul_bias_kernel_f32out if out_is_f32 else _matmul_bias_kernel_acc
    scratch = [] if out_is_f32 else [pltpu.VMEM((tm, tn), jnp.float32)]

    ods = jnp.dtype(out_dtype).itemsize
    vmem_bytes = (2 * (tm * tk + tn * tk) * cdt.itemsize   # double-buffered x, W
                  + 2 * tn * 4                             # bias
                  + 2 * tm * tn * ods                      # output
                  + (0 if out_is_f32 else tm * tn * 4))    # f32 accumulator
    # >= 32 MiB so large tiles are never rejected by v5e/v6e scoped defaults,
    # <= 48 MiB so v7x's 64 MiB physical VMEM is never oversubscribed.
    vmem_limit = int(min(max(2 * vmem_bytes, 32 * 1024 * 1024), 48 * 1024 * 1024))

    cost = pl.CostEstimate(
        flops=2 * N * K * F,
        transcendentals=0,
        bytes_accessed=int(xc.size * cdt.itemsize + wc.size * cdt.itemsize
                           + bc.size * 4 + N * F * ods),
    )

    # NOTE: for tiny problems an XLA-fused matmul beats kernel-launch overhead;
    # callers can bypass this wrapper at very small sizes if they care.
    return pl.pallas_call(
        kernel,
        out_shape=jax.ShapeDtypeStruct((N, F), out_dtype),
        grid_spec=pltpu.PrefetchScalarGridSpec(
            num_scalar_prefetch=0,
            grid=(grid_m, grid_n, grid_k),
            in_specs=[
                pl.BlockSpec((tm, tk), lambda i, j, k: (i, k)),   # x  [N, Kp]
                pl.BlockSpec((tn, tk), lambda i, j, k: (j, k)),   # W  [F, Kp] (no transpose)
                pl.BlockSpec((1, tn), lambda i, j, k: (0, j)),    # b  [1, F]  (f32)
            ],
            out_specs=pl.BlockSpec((tm, tn), lambda i, j, k: (i, j)),
            scratch_shapes=scratch,
        ),
        compiler_params=pltpu.CompilerParams(
            dimension_semantics=("parallel", "parallel", "arbitrary"),
            vmem_limit_bytes=vmem_limit,
        ),
        cost_estimate=cost,
    )(xc, wc, bc)


def presolved_linear(x, solved_w, solved_b, learned_w, learned_b, **kwargs):
    """Convenience wrapper; prefer prepare_...() once + presolved_linear_apply()."""
    compute_dtype = kwargs.pop("compute_dtype", None)
    w_full, b_full = prepare_presolved_linear_params(
        solved_w, solved_b, learned_w, learned_b, compute_dtype=compute_dtype)
    return presolved_linear_apply(x, w_full, b_full,
                                  compute_dtype=compute_dtype, **kwargs)


if __name__ == "__main__":
    key = jax.random.PRNGKey(0)
    kx, kw1, kb1, kw2, kb2 = jax.random.split(key, 5)

    # Small shapes consistent with the module.
    batch, in_features, out_features, solved = 16, 64, 48, 16
    learned = out_features - solved

    x = jax.random.normal(kx, (batch, in_features), dtype=jnp.float32)
    solved_w = jax.random.normal(kw1, (solved, in_features), dtype=jnp.float32)
    solved_b = jax.random.normal(kb1, (solved,), dtype=jnp.float32)
    learned_w = jax.random.normal(kw2, (learned, in_features), dtype=jnp.float32) * 0.1
    learned_b = jax.random.normal(kb2, (learned,), dtype=jnp.float32) * 0.1

    # Reference = the PyTorch forward: two linears, concat along features.
    y_ref = jnp.concatenate(
        [x @ solved_w.T + solved_b, x @ learned_w.T + learned_b], axis=1)

    # (1) f32 MXU operands (same dtype behaviour as the module).
    w_full, b_full = prepare_presolved_linear_params(
        solved_w, solved_b, learned_w, learned_b)
    y = jax.block_until_ready(presolved_linear_apply(x, w_full, b_full))
    assert y.shape == (batch, out_features) and y.dtype == x.dtype
    assert jnp.allclose(y, y_ref, atol=1e-3, rtol=1e-3), "f32 path mismatch"

    # (2) bf16 MXU operands, f32 accumulate (recommended on v5e/v6e/v7x).
    w_bf, b_bf = prepare_presolved_linear_params(
        solved_w, solved_b, learned_w, learned_b, compute_dtype=jnp.bfloat16)
    y_bf = jax.block_until_ready(
        presolved_linear_apply(x, w_bf, b_bf, compute_dtype=jnp.bfloat16))
    assert y_bf.shape == (batch, out_features) and y_bf.dtype == x.dtype
    assert jnp.allclose(y_bf, y_ref, atol=1e-1, rtol=5e-2), "bf16 path mismatch"

    # (3) Ragged M/F and a split (zero-padded) K axis: exercises the cdiv grid,
    #     masked edge stores and the K-tiling path.
    N2, K2, F2, S2 = 260, 1100, 200, 72
    kk = jax.random.split(key, 5)
    x2 = jax.random.normal(kk[0], (N2, K2), dtype=jnp.float32)
    sw2 = jax.random.normal(kk[1], (S2, K2), dtype=jnp.float32) * 0.05
    sb2 = jax.random.normal(kk[2], (S2,), dtype=jnp.float32)
    lw2 = jax.random.normal(kk[3], (F2 - S2, K2), dtype=jnp.float32) * 0.05
    lb2 = jax.random.normal(kk[4], (F2 - S2,), dtype=jnp.float32)
    w2, b2 = prepare_presolved_linear_params(sw2, sb2, lw2, lb2)
    y2 = jax.block_until_ready(presolved_linear_apply(x2, w2, b2))
    y2_ref = jnp.concatenate([x2 @ sw2.T + sb2, x2 @ lw2.T + lb2], axis=1)
    assert y2.shape == (N2, F2)
    assert jnp.allclose(y2, y2_ref, atol=2e-2, rtol=2e-3), "ragged-shape mismatch"

    print("KERNEL_OK")
</pallas_src>

<mosaic_0001>
module attributes {stable_mosaic.version = 11 : i64} {
  func.func @_matmul_bias_kernel_f32out(%arg0: i32, %arg1: i32, %arg2: i32, %arg3: memref<16x64xf32, #tpu.memory_space<vmem>>, %arg4: memref<48x64xf32, #tpu.memory_space<vmem>>, %arg5: memref<1x48xf32, #tpu.memory_space<vmem>>, %arg6: memref<16x48xf32, #tpu.memory_space<vmem>>) attributes {dimension_semantics = [#tpu.dimension_semantics<parallel>, #tpu.dimension_semantics<parallel>, #tpu.dimension_semantics<arbitrary>], iteration_bounds = array<i64: 1, 1, 1>, scalar_prefetch = 0 : i64, scratch_operands = 0 : i64, tpu.core_type = #tpu.core_type<tc>, window_params = [{transform_indices = @transform_0, window_bounds = array<i64: 16, 64>}, {transform_indices = @transform_1, window_bounds = array<i64: 48, 64>}, {transform_indices = @transform_2, window_bounds = array<i64: 1, 48>}, {transform_indices = @transform_3, window_bounds = array<i64: 16, 48>}]} {
    %c0_i32 = arith.constant 0 : i32
    %0 = arith.cmpi eq, %arg2, %c0_i32 : i32
    %1 = arith.extui %0 : i1 to i32
    %c0_i32_0 = arith.constant 0 : i32
    %2 = arith.cmpi ne, %1, %c0_i32_0 : i32
    scf.if %2 {
      %c0_8 = arith.constant 0 : index
      %c0_9 = arith.constant 0 : index
      %9 = vector.load %arg5[%c0_8, %c0_9] : memref<1x48xf32, #tpu.memory_space<vmem>>, vector<1x48xf32>
      %10 = vector.shape_cast %9 : vector<1x48xf32> to vector<1x48xf32>
      %11 = vector.broadcast %10 : vector<1x48xf32> to vector<16x48xf32>
      %c0_10 = arith.constant 0 : index
      %c0_11 = arith.constant 0 : index
      %12 = vector.load %arg6[%c0_10, %c0_11] : memref<16x48xf32, #tpu.memory_space<vmem>>, vector<16x48xf32>
      tpu.vector_store %arg6[%c0_10, %c0_11], %11 {strides = array<i32>} : memref<16x48xf32, #tpu.memory_space<vmem>>, vector<16x48xf32>,
    } else {
    }
    %c0 = arith.constant 0 : index
    %c0_1 = arith.constant 0 : index
    %3 = vector.load %arg6[%c0, %c0_1] : memref<16x48xf32, #tpu.memory_space<vmem>>, vector<16x48xf32>
    %c0_2 = arith.constant 0 : index
    %c0_3 = arith.constant 0 : index
    %4 = vector.load %arg3[%c0_2, %c0_3] : memref<16x64xf32, #tpu.memory_space<vmem>>, vector<16x64xf32>
    %c0_4 = arith.constant 0 : index
    %c0_5 = arith.constant 0 : index
    %5 = vector.load %arg4[%c0_4, %c0_5] : memref<48x64xf32, #tpu.memory_space<vmem>>, vector<48x64xf32>
    %cst = arith.constant dense<0.000000e+00> : vector<16x48xf32>
    %6 = tpu.matmul %4, %5, %cst {dimension_numbers = #tpu.dot_dimension_numbers<[1], [1], [0], [0], [0, 0, 1, 0], [], []>} : vector<16x64xf32>, vector<48x64xf32>, vector<16x48xf32> -> vector<16x48xf32>
    %7 = arith.addf %3, %6 : vector<16x48xf32>
    %c0_6 = arith.constant 0 : index
    %c0_7 = arith.constant 0 : index
    %8 = vector.load %arg6[%c0_6, %c0_7] : memref<16x48xf32, #tpu.memory_space<vmem>>, vector<16x48xf32>
    tpu.vector_store %arg6[%c0_6, %c0_7], %7 {strides = array<i32>} : memref<16x48xf32, #tpu.memory_space<vmem>>, vector<16x48xf32>,
    return
  }
  func.func @transform_0(%arg0: i32, %arg1: i32, %arg2: i32) -> (i32, i32) {
    %c0_i32 = arith.constant 0 : i32
    return %arg0, %arg2 : i32, i32
  }
  func.func @transform_1(%arg0: i32, %arg1: i32, %arg2: i32) -> (i32, i32) {
    %c0_i32 = arith.constant 0 : i32
    return %arg1, %arg2 : i32, i32
  }
  func.func @transform_2(%arg0: i32, %arg1: i32, %arg2: i32) -> (i32, i32) {
    %c0_i32 = arith.constant 0 : i32
    %c0_i32_0 = arith.constant 0 : i32
    return %c0_i32, %arg1 : i32, i32
  }
  func.func @transform_3(%arg0: i32, %arg1: i32, %arg2: i32) -> (i32, i32) {
    %c0_i32 = arith.constant 0 : i32
    return %arg0, %arg1 : i32, i32
  }
}

</mosaic_0001>

<llo_original>
// kernel: tpu_custom_call.1
$region0: #{tpu_custom_call.1}
  #allocation0 [shape = 'u32[]', space=smem, size = 0x4, offset = 0x4, fixed_abs, tag = 'smem constant byte address 0x4 - core index']
  #allocation1 [shape = 'u32[144,128]{1,0:T(1,128)}', space=vmem, size = 0x12000, scoped, tag = 'internal scratch']
  %s0 = inlined_call_operand.hbm [shape: f32[16,64], index: 0, kind: input, shape index: {}]
  %s1 = inlined_call_operand.hbm [shape: f32[48,64], index: 1, kind: input, shape index: {}]
  %s2 = inlined_call_operand.vmem [shape: f32[1,48], index: 2, kind: input, shape index: {}]
  %s3 = inlined_call_operand.hbm [shape: f32[16,48], index: 3, kind: output, shape index: {}]
  %s4 = sld [smem:[#allocation0]]
  $region34: #{tpu_custom_call.1} parent=0
    _
  %s6 = ssub.s32 1, %s4
  %s7 = scalar_select 0, %s6, %s4
  $region1: #{tpu_custom_call.1} parent=0
    #allocation2 [shape = 'u8[8192]{0}', space=vmem, size = 0x2000, scoped, tag = 'input window, operand 0, single buffered']
    #allocation3 [shape = 's32[1]{0}', space=sflag, size = 0x4, scoped, tag = 'scoped memory for tpu_custom_call.1']
    #allocation4 [shape = 's32[1]{0}', space=sflag, size = 0x4, scoped, tag = 'scoped memory for tpu_custom_call.1']
    #allocation5 [shape = 'u8[24576]{0}', space=vmem, size = 0x6000, scoped, tag = 'input window, operand 1, single buffered']
    #allocation6 [shape = 's32[1]{0}', space=sflag, size = 0x4, scoped, tag = 'scoped memory for tpu_custom_call.1']
    #allocation7 [shape = 'u8[8192]{0}', space=vmem, size = 0x2000, scoped, tag = 'output window, operand 0, single buffered']
    %8 = vsyncpa [#allocation3], 0
    %9 = vsyncpa [#allocation6], 0
    %10 = vsyncpa [#allocation4], 0
    // Predicated region
    $region2: #{tpu_custom_call.1} parent=1 // pred_check
      _
    $region3: #{tpu_custom_call.1} parent=1 // pred_check_branch
      %12 = sbr.rel (0) target = $region5
    $region4: #{tpu_custom_call.1} parent=1 // pred_region
      %s14 = ssub.s32 256, 256
      %15 = vsyncadd [#allocation3], %s14
      %s16 = sshll.u32 [#allocation2], 4
      %s17 = int_to_ptr.vmem [resolvable:$true] %s16
      %22 = dma.hbm_to_vmem [thread:$0]  %s0, 256, %s17, [#allocation3], 128, 128, 8
    $region5: #{tpu_custom_call.1} parent=1 // pred_fallthru
      _
    // Predicated region
    $region6: #{tpu_custom_call.1} parent=1 // pred_check
      _
    $region7: #{tpu_custom_call.1} parent=1 // pred_check_branch
      %24 = sbr.rel (0) target = $region9
    $region8: #{tpu_custom_call.1} parent=1 // pred_region
      %s26 = ssub.s32 768, 768
      %27 = vsyncadd [#allocation6], %s26
      %s28 = sshll.u32 [#allocation5], 4
      %s29 = int_to_ptr.vmem [resolvable:$true] %s28
      %34 = dma.hbm_to_vmem [thread:$0]  %s1, 768, %s29, [#allocation6], 128, 128, 8
    $region9: #{tpu_custom_call.1} parent=1 // pred_fallthru
      _
    // Predicated region
    $region10: #{tpu_custom_call.1} parent=1 // pred_check
      _
    $region11: #{tpu_custom_call.1} parent=1 // pred_check_branch
      %36 = sbr.rel (0) target = $region13
    $region12: #{tpu_custom_call.1} parent=1 // pred_region
      _
    $region13: #{tpu_custom_call.1} parent=1 // pred_fallthru
      _
    // Predicated region
    $region14: #{tpu_custom_call.1} parent=1 // pred_check
      _
    $region15: #{tpu_custom_call.1} parent=1 // pred_check_branch
      %38 = sbr.rel (0) target = $region17
    $region16: #{tpu_custom_call.1} parent=1 // pred_region
      %39 = dma.done [#allocation3], 256
    $region17: #{tpu_custom_call.1} parent=1 // pred_fallthru
      _
    // Predicated region
    $region18: #{tpu_custom_call.1} parent=1 // pred_check
      _
    $region19: #{tpu_custom_call.1} parent=1 // pred_check_branch
      %41 = sbr.rel (0) target = $region21
    $region20: #{tpu_custom_call.1} parent=1 // pred_region
      %42 = dma.done [#allocation6], 768
    $region21: #{tpu_custom_call.1} parent=1 // pred_fallthru
      _
    %p43 = scmp.eq.s32.totalorder 0, 0
    // Predicated region
    $region22: #{tpu_custom_call.1} parent=1 // pred_check
      %p44 = pneg %p43
    $region23: #{tpu_custom_call.1} parent=1 // pred_check_branch
      %46 = sbr.rel (%p44) target = $region25
    $region24: #{tpu_custom_call.1} parent=1 // pred_region
      %v47 = vld [vmem:[%s2] sm:$0x1]
      %v49 = vlaneseq
      %v50 = vshrl.u32 %v49, 7
      %v51 = vsub.s32 0, %v50
      %v52 = vrot.slane %v47, %v51
      %vm54 = vcmask 392192
      %55 = vst.msk [vmem:[#allocation7] sm:$0xff] %vm54, %v52
      %56 = vst.msk [vmem:[#allocation7 + $0x8] sm:$0xff] %vm54, %v52
    $region25: #{tpu_custom_call.1} parent=1 // pred_fallthru
      _
    %v57 = vld [vmem:[#allocation7] sm:$0xff]
    %v58 = vld [vmem:[#allocation7 + $0x8] sm:$0xff]
    %v59 = vld [vmem:[#allocation2] sm:$0xff]
    %v60 = vld [vmem:[#allocation2 + $0x8] sm:$0xff]
    %v61 = vld [vmem:[#allocation5] sm:$0xff]
    %v62 = vld [vmem:[#allocation5 + $0x8] sm:$0xff]
    %v63 = vld [vmem:[#allocation5 + $0x10] sm:$0xff]
    %v64 = vld [vmem:[#allocation5 + $0x18] sm:$0xff]
    %v65 = vld [vmem:[#allocation5 + $0x20] sm:$0xff]
    %v66 = vld [vmem:[#allocation5 + $0x28] sm:$0xff]
    %vm67 = vcmask 523264
    %v69 = vsel %vm67, %v59, 0
    %v72 = vsel %vm67, %v60, 0
    %v75 = vsel %vm67, %v61, 0
    %v78 = vsel %vm67, %v62, 0
    %v81 = vsel %vm67, %v63, 0
    %v84 = vsel %vm67, %v64, 0
    %v87 = vsel %vm67, %v65, 0
    %v90 = vsel %vm67, %v66, 0
    %92 = vmatprep.subr.mxu0 0.0
    %93 = vmatpush1.xpose.msra.mxu0 %v75
    %94 = vmatprep.subr.mxu0 0.0
    %95 = vmatpush1.xpose.msra.mxu0 %v78
    %96 = vmatprep.subr.mxu0 0.0
    %97 = vmatpush1.xpose.msra.mxu0 %v81
    %98 = vmatprep.subr.mxu0 0.0
    %99 = vmatpush1.xpose.msra.mxu0 %v84
    %100 = vmatprep.subr.mxu0 0.0
    %101 = vmatpush1.xpose.msra.mxu0 %v87
    %102 = vmatprep.subr.mxu0 0.0
    %103 = vmatpush1.xpose.msra.mxu0 %v90
    %104 = vmatprep.subr.mxu0 0.0
    %105 = vmatpush1.xpose.msra.mxu0 0.0
    %106 = vmatprep.subr.mxu0 0.0
    %107 = vmatpush1.xpose.msra.mxu0 0.0
    %108 = vmatprep.subr.mxu0 0.0
    %109 = vmatpush1.xpose.msra.mxu0 0.0
    %110 = vmatprep.subr.mxu0 0.0
    %111 = vmatpush1.xpose.msra.mxu0 0.0
    %112 = vmatprep.subr.mxu0 0.0
    %113 = vmatpush1.xpose.msra.mxu0 0.0
    %114 = vmatprep.subr.mxu0 0.0
    %115 = vmatpush1.xpose.msra.mxu0 0.0
    %116 = vmatprep.subr.mxu0 0.0
    %117 = vmatpush1.xpose.msra.mxu0 0.0
    %118 = vmatprep.subr.mxu0 0.0
    %119 = vmatpush1.xpose.msra.mxu0 0.0
    %120 = vmatprep.subr.mxu0 0.0
    %121 = vmatpush1.xpose.msra.mxu0 0.0
    %122 = vmatprep.subr.mxu0 0.0
    %123 = vmatpush1.xpose.msra.mxu0 0.0
    %124 = vmatprep.subr.mxu0 0.0
    %125 = vmatpush1.xpose.msra.mxu0 0.0
    %126 = vmatprep.subr.mxu0 0.0
    %127 = vmatpush1.xpose.msra.mxu0 0.0
    %128 = vmatprep.subr.mxu0 0.0
    %129 = vmatpush1.xpose.msra.mxu0 0.0
    %130 = vmatprep.subr.mxu0 0.0
    %131 = vmatpush1.xpose.msra.mxu0 0.0
    %132 = vmatprep.subr.mxu0 0.0
    %133 = vmatpush1.xpose.msra.mxu0 0.0
    %134 = vmatprep.subr.mxu0 0.0
    %135 = vmatpush1.xpose.msra.mxu0 0.0
    %136 = vmatprep.subr.mxu0 0.0
    %137 = vmatpush1.xpose.msra.mxu0 0.0
    %138 = vmatprep.subr.mxu0 0.0
    %139 = vmatpush1.xpose.msra.mxu0 0.0
    %140 = vmatprep.subr.mxu0 0.0
    %141 = vmatpush1.xpose.msra.mxu0 0.0
    %142 = vmatprep.subr.mxu0 0.0
    %143 = vmatpush1.xpose.msra.mxu0 0.0
    %144 = vmatprep.subr.mxu0 0.0
    %145 = vmatpush1.xpose.msra.mxu0 0.0
    %146 = vmatprep.subr.mxu0 0.0
    %147 = vmatpush1.xpose.msra.mxu0 0.0
    %148 = vmatprep.subr.mxu0 0.0
    %149 = vmatpush1.xpose.msra.mxu0 0.0
    %150 = vmatprep.subr.mxu0 0.0
    %151 = vmatpush1.xpose.msra.mxu0 0.0
    %152 = vmatprep.subr.mxu0 0.0
    %153 = vmatpush1.xpose.msra.mxu0 0.0
    %154 = vmatprep.subr.mxu0 0.0
    %155 = vmatpush1.xpose.msra.mxu0 0.0
    %156 = vmatprep.mubr.f32.mxu0 0.0
    %157 = vmatmul.mubr.f32.gmra.mrb[0].mxu0 %v69
    %v158 = vpop.f32.mrb[0].mxu0
    %v159 = vadd.f32 0.0, %v158
    %v160 = vpop.f32.mrb[0].mxu0
    %161 = vmatprep.mubr.f32.mxu0 0.0
    %162 = vmatmul.mubr.f32.gmra.mrb[0].mxu0 %v72
    %v163 = vpop.f32.mrb[0].mxu0
    %v164 = vadd.f32 0.0, %v163
    %v165 = vpop.f32.mrb[0].mxu0
    %166 = vdwg.mxu0
    %v167 = vadd.f32 %v57, %v159
    %v168 = vadd.f32 %v58, %v164
    %vm169 = vcmask 392192
    %170 = vst.msk [vmem:[#allocation7] sm:$0xff] %vm169, %v167
    %171 = vst.msk [vmem:[#allocation7 + $0x8] sm:$0xff] %vm169, %v168
    // Predicated region
    $region26: #{tpu_custom_call.1} parent=1 // pred_check
      _
    $region27: #{tpu_custom_call.1} parent=1 // pred_check_branch
      %173 = sbr.rel (0) target = $region29
    $region28: #{tpu_custom_call.1} parent=1 // pred_region
      %s175 = ssub.s32 256, 256
      %176 = vsyncadd [#allocation4], %s175
      %s177 = sshll.u32 [#allocation7], 4
      %s178 = int_to_ptr.vmem [resolvable:$true] %s177
      %183 = dma.vmem_to_hbm [thread:$0]  %s178, 256, %s3, [#allocation4], 128, 128, 8
    $region29: #{tpu_custom_call.1} parent=1 // pred_fallthru
      _
    // Predicated region
    $region30: #{tpu_custom_call.1} parent=1 // pred_check
      _
    $region31: #{tpu_custom_call.1} parent=1 // pred_check_branch
      %185 = sbr.rel (0) target = $region33
    $region32: #{tpu_custom_call.1} parent=1 // pred_region
      %186 = dma.done [#allocation4], 256
    $region33: #{tpu_custom_call.1} parent=1 // pred_fallthru
      _
    %187 = vsyncpa [#allocation3], 1
    %188 = vsyncpa [#allocation6], 1
    %189 = vsyncpa [#allocation4], 1

</llo_original>
